<compile_context>
chip_gen: v7x
topology: tpu7x:2x2x1
jax: 0.10.0
libtpu: 0.0.40
codegen_flags: <defaults>
</compile_context>

<pallas_src>
import jax
import jax.numpy as jnp
from jax.experimental import pallas as pl
from jax.experimental.pallas import tpu as pltpu


def _round_up(n, m):
    return ((n + m - 1) // m) * m


def autoencoder_kernel(x_ref, w1_ref, b1_ref, w2_ref, b2_ref, o_ref):
    # x_ref: (10, TILE_B) in the I/O dtype.  bf16 goes straight into the MXU (bf16 x bf16
    # with f32 accumulation) — no (16, TILE_B) f32 upcast temporary; f32 path untouched.
    x = x_ref[...]

    # Encoder: h = relu(W1 @ x + b1)        (W1: [5, 10], h: [5, TILE_B] in f32)
    h = jnp.dot(w1_ref[...], x, preferred_element_type=jnp.float32) + b1_ref[...]
    h = jnp.maximum(h, 0.0).astype(x.dtype)   # bf16 path: bf16 back into the MXU; f32: no-op

    # Decoder pre-activation: y = W2 @ h + b2   (W2: [10, 5], y: [10, TILE_B] in f32)
    y = jnp.dot(w2_ref[...], h, preferred_element_type=jnp.float32) + b2_ref[...]

    # NOTE (v7x MXU-orientation audit): with x as the big streaming operand, every 256
    # batch lanes needs a fresh MXU weight-push for only ~1 matmul of useful work.  If a
    # bundle dump shows the vector-extended slot binding on v7x, move these K=10 / K=5
    # contractions to the VPU as sublane-broadcast multiply-adds
    # (x_ref[pl.ds(k, 8, stride=0)] * w[:, k:k+1]).  Hidden under HBM DMA on v5e/v6e.

    # sigmoid(y) == 0.5 * tanh(0.5 * y) + 0.5  -> single EUP op per vreg (vs exp + divide).
    o_ref[...] = (0.5 * jnp.tanh(0.5 * y) + 0.5).astype(o_ref.dtype)


def ratio_autoencoder_fm(x_fm, w1, b1, w2, b2, *, tile_b=32768, core_parallel=False):
    """Feature-major forward pass (the fast path — zero wrapper relayout).

    x_fm: [10, B] (features, batch).  Weights in PyTorch layout: w1 [5,10], b1 [5] or
    [5,1], w2 [10,5], b2 [10] or [10,1].  Returns [10, B] in x_fm.dtype.
    Compute is f32 inside the kernel; bf16 I/O feeds the MXU directly.
    """
    d_in, B = x_fm.shape
    d_hid = w1.shape[0]
    d_out = w2.shape[0]
    io_dtype = x_fm.dtype

    # Tiny-batch guard only (off the hot path): lane tiles are 128 wide.
    orig_b = B
    if B < 128:
        x_fm = jnp.pad(x_fm, ((0, 0), (0, 128 - B)))
        B = 128

    # Lane tile: multiple of 128, large enough that per-step DMA dwarfs the ~0.35us grid
    # step overhead, capped at 64K lanes so double-buffered I/O + f32 temps fit v7x's
    # 64 MiB VMEM.  (v5e/v6e with 128 MiB VMEM can lift the cap + vmem_limit toward 128K.)
    tile_b = _round_up(min(max(tile_b, 128), 65536), 128)
    tile_b = min(tile_b, _round_up(B, 128))
    grid = (pl.cdiv(B, tile_b),)   # ragged tail handled by partial-block writeback masking

    # bf16 I/O -> bf16 weights straight to the MXU; otherwise keep everything f32.
    w_dtype = jnp.bfloat16 if io_dtype == jnp.bfloat16 else jnp.float32
    w1c = w1.astype(w_dtype)
    w2c = w2.astype(w_dtype)
    b1f = b1.reshape(d_hid, 1).astype(jnp.float32)
    b2f = b2.reshape(d_out, 1).astype(jnp.float32)

    # Default "parallel" is safe everywhere; core_parallel=True opts into explicit
    # dual-TensorCore sharding of the batch tiles on v7x.
    dim_sem = (pltpu.CORE_PARALLEL,) if core_parallel else ("parallel",)

    out = pl.pallas_call(
        autoencoder_kernel,
        out_shape=jax.ShapeDtypeStruct((d_out, B), io_dtype),
        grid_spec=pltpu.PrefetchScalarGridSpec(
            num_scalar_prefetch=0,
            grid=grid,
            in_specs=[
                pl.BlockSpec((d_in, tile_b), lambda i: (0, i)),   # x tile (streamed)
                pl.BlockSpec((d_hid, d_in), lambda i: (0, 0)),    # W1 (VMEM-resident)
                pl.BlockSpec((d_hid, 1), lambda i: (0, 0)),       # b1 (VMEM-resident)
                pl.BlockSpec((d_out, d_hid), lambda i: (0, 0)),   # W2 (VMEM-resident)
                pl.BlockSpec((d_out, 1), lambda i: (0, 0)),       # b2 (VMEM-resident)
            ],
            out_specs=pl.BlockSpec((d_out, tile_b), lambda i: (0, i)),
        ),
        compiler_params=pltpu.CompilerParams(
            dimension_semantics=dim_sem,
            vmem_limit_bytes=48 * 1024 * 1024,   # v7x-safe; v5e/v6e have headroom to spare
        ),
    )(x_fm, w1c, b1f, w2c, b2f)

    if orig_b != B:
        out = out[:, :orig_b]
    return out


def ratio_autoencoder(x, w1, b1, w2, b2, **kwargs):
    """Batch-major convenience wrapper (PyTorch [B, 10] layout).

    The two transposes here are separate XLA relayout passes and roughly triple HBM
    traffic for this bandwidth-bound op — prefer ratio_autoencoder_fm in production.
    """
    return ratio_autoencoder_fm(x.T, w1, b1, w2, b2, **kwargs).T


def init_params(key):
    # nn.Linear default init: U(-1/sqrt(fan_in), 1/sqrt(fan_in)); PyTorch [out, in] layout.
    k1, k2, k3, k4 = jax.random.split(key, 4)
    bound1 = 1.0 / jnp.sqrt(10.0)
    bound2 = 1.0 / jnp.sqrt(5.0)
    w1 = jax.random.uniform(k1, (5, 10), jnp.float32, -bound1, bound1)
    b1 = jax.random.uniform(k2, (5, 1), jnp.float32, -bound1, bound1)
    w2 = jax.random.uniform(k3, (10, 5), jnp.float32, -bound2, bound2)
    b2 = jax.random.uniform(k4, (10, 1), jnp.float32, -bound2, bound2)
    return w1, b1, w2, b2


def _reference(x, w1, b1, w2, b2):
    # Batch-major [B, 10] reference in plain JAX.
    h = jnp.maximum(x @ w1.T + b1.reshape(1, -1), 0.0)
    return jax.nn.sigmoid(h @ w2.T + b2.reshape(1, -1))


if __name__ == "__main__":
    key = jax.random.PRNGKey(0)
    kx, kp = jax.random.split(key)
    w1, b1, w2, b2 = init_params(kp)

    # 1) f32 I/O, PyTorch batch-major layout via the compat wrapper, single 128-lane tile.
    B = 128
    x = jax.random.normal(kx, (B, 10), jnp.float32)
    out_f32 = jax.block_until_ready(ratio_autoencoder(x, w1, b1, w2, b2))
    ref = _reference(x, w1, b1, w2, b2)
    assert out_f32.shape == (B, 10)
    assert jnp.allclose(out_f32, ref, atol=1e-4, rtol=1e-4)

    # 2) bf16 I/O on the feature-major fast path: 3-step grid with a ragged tail
    #    (300 = 2*128 + 44) — exercises the no-pad partial-block writeback.
    B2 = 300
    x2_fm = jax.random.normal(kx, (10, B2), jnp.float32).astype(jnp.bfloat16)
    out_bf16 = jax.block_until_ready(
        ratio_autoencoder_fm(x2_fm, w1, b1, w2, b2, tile_b=128))
    ref2 = _reference(x2_fm.astype(jnp.float32).T, w1, b1, w2, b2).T
    assert out_bf16.shape == (10, B2)
    assert jnp.allclose(out_bf16.astype(jnp.float32), ref2, atol=1e-2, rtol=0)

    print("KERNEL_OK")
</pallas_src>

<mosaic_0001>
module attributes {stable_mosaic.version = 11 : i64} {
  func.func @autoencoder_kernel(%arg0: i32, %arg1: memref<10x128xf32, #tpu.memory_space<vmem>>, %arg2: memref<5x10xf32, #tpu.memory_space<vmem>>, %arg3: memref<5x1xf32, #tpu.memory_space<vmem>>, %arg4: memref<10x5xf32, #tpu.memory_space<vmem>>, %arg5: memref<10x1xf32, #tpu.memory_space<vmem>>, %arg6: memref<10x128xf32, #tpu.memory_space<vmem>>) attributes {dimension_semantics = [#tpu.dimension_semantics<parallel>], iteration_bounds = array<i64: 1>, scalar_prefetch = 0 : i64, scratch_operands = 0 : i64, tpu.core_type = #tpu.core_type<tc>, window_params = [{transform_indices = @transform_0, window_bounds = array<i64: 10, 128>}, {pipeline_mode = #tpu.pipeline_mode<synchronous>, transform_indices = @transform_1, window_bounds = array<i64: 5, 10>}, {pipeline_mode = #tpu.pipeline_mode<synchronous>, transform_indices = @transform_2, window_bounds = array<i64: 5, 1>}, {pipeline_mode = #tpu.pipeline_mode<synchronous>, transform_indices = @transform_3, window_bounds = array<i64: 10, 5>}, {pipeline_mode = #tpu.pipeline_mode<synchronous>, transform_indices = @transform_4, window_bounds = array<i64: 10, 1>}, {transform_indices = @transform_5, window_bounds = array<i64: 10, 128>}]} {
    %c0 = arith.constant 0 : index
    %c0_0 = arith.constant 0 : index
    %0 = vector.load %arg1[%c0, %c0_0] : memref<10x128xf32, #tpu.memory_space<vmem>>, vector<10x128xf32>
    %c0_1 = arith.constant 0 : index
    %c0_2 = arith.constant 0 : index
    %1 = vector.load %arg2[%c0_1, %c0_2] : memref<5x10xf32, #tpu.memory_space<vmem>>, vector<5x10xf32>
    %cst = arith.constant dense<0.000000e+00> : vector<5x128xf32>
    %2 = tpu.matmul %1, %0, %cst {dimension_numbers = #tpu.dot_dimension_numbers<[1], [0], [0], [1], [0, 0, 1, 1], [], []>} : vector<5x10xf32>, vector<10x128xf32>, vector<5x128xf32> -> vector<5x128xf32>
    %c0_3 = arith.constant 0 : index
    %c0_4 = arith.constant 0 : index
    %3 = vector.load %arg3[%c0_3, %c0_4] : memref<5x1xf32, #tpu.memory_space<vmem>>, vector<5x1xf32>
    %4 = vector.broadcast %3 : vector<5x1xf32> to vector<5x128xf32>
    %5 = arith.addf %2, %4 : vector<5x128xf32>
    %cst_5 = arith.constant 0.000000e+00 : f32
    %6 = vector.broadcast %cst_5 : f32 to vector<5x128xf32>
    %7 = arith.maximumf %5, %6 : vector<5x128xf32>
    %c0_6 = arith.constant 0 : index
    %c0_7 = arith.constant 0 : index
    %8 = vector.load %arg4[%c0_6, %c0_7] : memref<10x5xf32, #tpu.memory_space<vmem>>, vector<10x5xf32>
    %cst_8 = arith.constant dense<0.000000e+00> : vector<10x128xf32>
    %9 = tpu.matmul %8, %7, %cst_8 {dimension_numbers = #tpu.dot_dimension_numbers<[1], [0], [0], [1], [0, 0, 1, 1], [], []>} : vector<10x5xf32>, vector<5x128xf32>, vector<10x128xf32> -> vector<10x128xf32>
    %c0_9 = arith.constant 0 : index
    %c0_10 = arith.constant 0 : index
    %10 = vector.load %arg5[%c0_9, %c0_10] : memref<10x1xf32, #tpu.memory_space<vmem>>, vector<10x1xf32>
    %11 = vector.broadcast %10 : vector<10x1xf32> to vector<10x128xf32>
    %12 = arith.addf %9, %11 : vector<10x128xf32>
    %cst_11 = arith.constant 5.000000e-01 : f32
    %13 = vector.broadcast %cst_11 : f32 to vector<10x128xf32>
    %14 = arith.mulf %13, %12 : vector<10x128xf32>
    %15 = math.tanh %14 : vector<10x128xf32>
    %cst_12 = arith.constant 5.000000e-01 : f32
    %16 = vector.broadcast %cst_12 : f32 to vector<10x128xf32>
    %17 = arith.mulf %16, %15 : vector<10x128xf32>
    %cst_13 = arith.constant 5.000000e-01 : f32
    %18 = vector.broadcast %cst_13 : f32 to vector<10x128xf32>
    %19 = arith.addf %17, %18 : vector<10x128xf32>
    %c0_14 = arith.constant 0 : index
    %c0_15 = arith.constant 0 : index
    %20 = vector.load %arg6[%c0_14, %c0_15] : memref<10x128xf32, #tpu.memory_space<vmem>>, vector<10x128xf32>
    tpu.vector_store %arg6[%c0_14, %c0_15], %19 {strides = array<i32>} : memref<10x128xf32, #tpu.memory_space<vmem>>, vector<10x128xf32>,
    return
  }
  func.func @transform_0(%arg0: i32) -> (i32, i32) {
    %c0_i32 = arith.constant 0 : i32
    %c0_i32_0 = arith.constant 0 : i32
    return %c0_i32, %arg0 : i32, i32
  }
  func.func @transform_1(%arg0: i32) -> (i32, i32) {
    %c0_i32 = arith.constant 0 : i32
    %c0_i32_0 = arith.constant 0 : i32
    %c0_i32_1 = arith.constant 0 : i32
    return %c0_i32, %c0_i32_0 : i32, i32
  }
  func.func @transform_2(%arg0: i32) -> (i32, i32) {
    %c0_i32 = arith.constant 0 : i32
    %c0_i32_0 = arith.constant 0 : i32
    %c0_i32_1 = arith.constant 0 : i32
    return %c0_i32, %c0_i32_0 : i32, i32
  }
  func.func @transform_3(%arg0: i32) -> (i32, i32) {
    %c0_i32 = arith.constant 0 : i32
    %c0_i32_0 = arith.constant 0 : i32
    %c0_i32_1 = arith.constant 0 : i32
    return %c0_i32, %c0_i32_0 : i32, i32
  }
  func.func @transform_4(%arg0: i32) -> (i32, i32) {
    %c0_i32 = arith.constant 0 : i32
    %c0_i32_0 = arith.constant 0 : i32
    %c0_i32_1 = arith.constant 0 : i32
    return %c0_i32, %c0_i32_0 : i32, i32
  }
  func.func @transform_5(%arg0: i32) -> (i32, i32) {
    %c0_i32 = arith.constant 0 : i32
    %c0_i32_0 = arith.constant 0 : i32
    return %c0_i32, %arg0 : i32, i32
  }
}

</mosaic_0001>

<llo_original>
// kernel: tpu_custom_call.1
$region0: #{tpu_custom_call.1}
  #allocation0 [shape = 'u32[]', space=smem, size = 0x4, offset = 0x4, fixed_abs, tag = 'smem constant byte address 0x4 - core index']
  #allocation1 [shape = 'u32[144,128]{1,0:T(1,128)}', space=vmem, size = 0x12000, scoped, tag = 'internal scratch']
  %s0 = inlined_call_operand.vmem [shape: f32[10,128], index: 0, kind: input, shape index: {}]
  %s1 = inlined_call_operand.vmem [shape: f32[5,10], index: 1, kind: input, shape index: {}]
  %s2 = inlined_call_operand.vmem [shape: f32[5,1], index: 2, kind: input, shape index: {}]
  %s3 = inlined_call_operand.vmem [shape: f32[10,5], index: 3, kind: input, shape index: {}]
  %s4 = inlined_call_operand.vmem [shape: f32[10,1], index: 4, kind: input, shape index: {}]
  %s5 = inlined_call_operand.hbm [shape: f32[10,128], index: 5, kind: output, shape index: {}]
  %s6 = sld [smem:[#allocation0]]
  $region30: #{tpu_custom_call.1} parent=0
    _
  %s8 = ssub.s32 1, %s6
  %s9 = scalar_select 0, %s8, %s6
  $region1: #{tpu_custom_call.1} parent=0
    #allocation2 [shape = 'u8[8192]{0}', space=vmem, size = 0x2000, scoped, tag = 'output window, operand 0, single buffered']
    #allocation3 [shape = 's32[1]{0}', space=sflag, size = 0x4, scoped, tag = 'scoped memory for tpu_custom_call.1']
    %10 = vsyncpa [#allocation3], 0
    // Predicated region
    $region2: #{tpu_custom_call.1} parent=1 // pred_check
      _
    $region3: #{tpu_custom_call.1} parent=1 // pred_check_branch
      %12 = sbr.rel (0) target = $region5
    $region4: #{tpu_custom_call.1} parent=1 // pred_region
      _
    $region5: #{tpu_custom_call.1} parent=1 // pred_fallthru
      _
    // Predicated region
    $region6: #{tpu_custom_call.1} parent=1 // pred_check
      _
    $region7: #{tpu_custom_call.1} parent=1 // pred_check_branch
      %14 = sbr.rel (0) target = $region9
    $region8: #{tpu_custom_call.1} parent=1 // pred_region
      _
    $region9: #{tpu_custom_call.1} parent=1 // pred_fallthru
      _
    // Predicated region
    $region10: #{tpu_custom_call.1} parent=1 // pred_check
      _
    $region11: #{tpu_custom_call.1} parent=1 // pred_check_branch
      %16 = sbr.rel (0) target = $region13
    $region12: #{tpu_custom_call.1} parent=1 // pred_region
      _
    $region13: #{tpu_custom_call.1} parent=1 // pred_fallthru
      _
    // Predicated region
    $region14: #{tpu_custom_call.1} parent=1 // pred_check
      _
    $region15: #{tpu_custom_call.1} parent=1 // pred_check_branch
      %18 = sbr.rel (0) target = $region17
    $region16: #{tpu_custom_call.1} parent=1 // pred_region
      _
    $region17: #{tpu_custom_call.1} parent=1 // pred_fallthru
      _
    // Predicated region
    $region18: #{tpu_custom_call.1} parent=1 // pred_check
      _
    $region19: #{tpu_custom_call.1} parent=1 // pred_check_branch
      %20 = sbr.rel (0) target = $region21
    $region20: #{tpu_custom_call.1} parent=1 // pred_region
      _
    $region21: #{tpu_custom_call.1} parent=1 // pred_fallthru
      _
    %v21 = vld [vmem:[%s0] sm:$0xff]
    %v22 = vld [vmem:[%s0 + $0x8] sm:$0x3]
    %v23 = vld [vmem:[%s1] sm:$0x1f]
    %v24 = vld [vmem:[%s2] sm:$0x1f]
    %26 = vset.pattern.permute.xlu0 0
    %27 = vperm.xlu0 %26, %v24
    %v28 = vpop.permute.xlu0 %27
    %vm30 = vcmask 80896
    %v32 = vsel %vm30, %v23, 0
    %vm34 = vcmask 1041408
    %v36 = vsel %vm34, %v22, 0
    %38 = vmatprep.subr.mxu0 0.0
    %39 = vmatpush1.msra.mxu0 %v21
    %40 = vmatprep.subr.mxu0 0.0
    %41 = vmatpush1.msra.mxu0 %v36
    %42 = vmatprep.subr.mxu0 0.0
    %43 = vmatpush1.msra.mxu0 0.0
    %44 = vmatprep.subr.mxu0 0.0
    %45 = vmatpush1.msra.mxu0 0.0
    %46 = vmatprep.subr.mxu0 0.0
    %47 = vmatpush1.msra.mxu0 0.0
    %48 = vmatprep.subr.mxu0 0.0
    %49 = vmatpush1.msra.mxu0 0.0
    %50 = vmatprep.subr.mxu0 0.0
    %51 = vmatpush1.msra.mxu0 0.0
    %52 = vmatprep.subr.mxu0 0.0
    %53 = vmatpush1.msra.mxu0 0.0
    %54 = vmatprep.subr.mxu0 0.0
    %55 = vmatpush1.msra.mxu0 0.0
    %56 = vmatprep.subr.mxu0 0.0
    %57 = vmatpush1.msra.mxu0 0.0
    %58 = vmatprep.subr.mxu0 0.0
    %59 = vmatpush1.msra.mxu0 0.0
    %60 = vmatprep.subr.mxu0 0.0
    %61 = vmatpush1.msra.mxu0 0.0
    %62 = vmatprep.subr.mxu0 0.0
    %63 = vmatpush1.msra.mxu0 0.0
    %64 = vmatprep.subr.mxu0 0.0
    %65 = vmatpush1.msra.mxu0 0.0
    %66 = vmatprep.subr.mxu0 0.0
    %67 = vmatpush1.msra.mxu0 0.0
    %68 = vmatprep.subr.mxu0 0.0
    %69 = vmatpush1.msra.mxu0 0.0
    %70 = vmatprep.subr.mxu0 0.0
    %71 = vmatpush1.msra.mxu0 0.0
    %72 = vmatprep.subr.mxu0 0.0
    %73 = vmatpush1.msra.mxu0 0.0
    %74 = vmatprep.subr.mxu0 0.0
    %75 = vmatpush1.msra.mxu0 0.0
    %76 = vmatprep.subr.mxu0 0.0
    %77 = vmatpush1.msra.mxu0 0.0
    %78 = vmatprep.subr.mxu0 0.0
    %79 = vmatpush1.msra.mxu0 0.0
    %80 = vmatprep.subr.mxu0 0.0
    %81 = vmatpush1.msra.mxu0 0.0
    %82 = vmatprep.subr.mxu0 0.0
    %83 = vmatpush1.msra.mxu0 0.0
    %84 = vmatprep.subr.mxu0 0.0
    %85 = vmatpush1.msra.mxu0 0.0
    %86 = vmatprep.subr.mxu0 0.0
    %87 = vmatpush1.msra.mxu0 0.0
    %88 = vmatprep.subr.mxu0 0.0
    %89 = vmatpush1.msra.mxu0 0.0
    %90 = vmatprep.subr.mxu0 0.0
    %91 = vmatpush1.msra.mxu0 0.0
    %92 = vmatprep.subr.mxu0 0.0
    %93 = vmatpush1.msra.mxu0 0.0
    %94 = vmatprep.subr.mxu0 0.0
    %95 = vmatpush1.msra.mxu0 0.0
    %96 = vmatprep.subr.mxu0 0.0
    %97 = vmatpush1.msra.mxu0 0.0
    %98 = vmatprep.subr.mxu0 0.0
    %99 = vmatpush1.msra.mxu0 0.0
    %100 = vmatprep.subr.mxu0 0.0
    %101 = vmatpush1.msra.mxu0 0.0
    %102 = vmatprep.mubr.f32.mxu0 0.0
    %103 = vmatmul.mubr.f32.gmra.mrb[0].mxu0 %v32
    %v104 = vpop.f32.mrb[0].mxu0
    %v105 = vadd.f32 %v28, %v104
    %v106 = vpop.f32.mrb[0].mxu0
    %107 = vdwg.mxu0
    %v108 = vmax.f32 %v105, 0.0
    %v109 = vld [vmem:[%s3] sm:$0xff]
    %v110 = vld [vmem:[%s3 + $0x8] sm:$0x3]
    %v111 = vld [vmem:[%s4] sm:$0xff]
    %v112 = vld [vmem:[%s4 + $0x8] sm:$0x3]
    %114 = vset.pattern.permute.xlu0 0
    %115 = vperm.xlu0 %114, %v111
    %v116 = vpop.permute.xlu0 %115
    %119 = vset.pattern.permute.xlu0 0
    %120 = vperm.xlu0 %119, %v112
    %v121 = vpop.permute.xlu0 %120
    %vm123 = vcmask 39936
    %v125 = vsel %vm123, %v109, 0
    %v128 = vsel %vm123, %v110, 0
    %vm130 = vcmask 1044480
    %v132 = vsel %vm130, %v108, 0
    %134 = vmatprep.subr.mxu0 0.0
    %135 = vmatpush1.msra.mxu0 %v132
    %136 = vmatprep.subr.mxu0 0.0
    %137 = vmatpush1.msra.mxu0 0.0
    %138 = vmatprep.subr.mxu0 0.0
    %139 = vmatpush1.msra.mxu0 0.0
    %140 = vmatprep.subr.mxu0 0.0
    %141 = vmatpush1.msra.mxu0 0.0
    %142 = vmatprep.subr.mxu0 0.0
    %143 = vmatpush1.msra.mxu0 0.0
    %144 = vmatprep.subr.mxu0 0.0
    %145 = vmatpush1.msra.mxu0 0.0
    %146 = vmatprep.subr.mxu0 0.0
    %147 = vmatpush1.msra.mxu0 0.0
    %148 = vmatprep.subr.mxu0 0.0
    %149 = vmatpush1.msra.mxu0 0.0
    %150 = vmatprep.subr.mxu0 0.0
    %151 = vmatpush1.msra.mxu0 0.0
    %152 = vmatprep.subr.mxu0 0.0
    %153 = vmatpush1.msra.mxu0 0.0
    %154 = vmatprep.subr.mxu0 0.0
    %155 = vmatpush1.msra.mxu0 0.0
    %156 = vmatprep.subr.mxu0 0.0
    %157 = vmatpush1.msra.mxu0 0.0
    %158 = vmatprep.subr.mxu0 0.0
    %159 = vmatpush1.msra.mxu0 0.0
    %160 = vmatprep.subr.mxu0 0.0
    %161 = vmatpush1.msra.mxu0 0.0
    %162 = vmatprep.subr.mxu0 0.0
    %163 = vmatpush1.msra.mxu0 0.0
    %164 = vmatprep.subr.mxu0 0.0
    %165 = vmatpush1.msra.mxu0 0.0
    %166 = vmatprep.subr.mxu0 0.0
    %167 = vmatpush1.msra.mxu0 0.0
    %168 = vmatprep.subr.mxu0 0.0
    %169 = vmatpush1.msra.mxu0 0.0
    %170 = vmatprep.subr.mxu0 0.0
    %171 = vmatpush1.msra.mxu0 0.0
    %172 = vmatprep.subr.mxu0 0.0
    %173 = vmatpush1.msra.mxu0 0.0
    %174 = vmatprep.subr.mxu0 0.0
    %175 = vmatpush1.msra.mxu0 0.0
    %176 = vmatprep.subr.mxu0 0.0
    %177 = vmatpush1.msra.mxu0 0.0
    %178 = vmatprep.subr.mxu0 0.0
    %179 = vmatpush1.msra.mxu0 0.0
    %180 = vmatprep.subr.mxu0 0.0
    %181 = vmatpush1.msra.mxu0 0.0
    %182 = vmatprep.subr.mxu0 0.0
    %183 = vmatpush1.msra.mxu0 0.0
    %184 = vmatprep.subr.mxu0 0.0
    %185 = vmatpush1.msra.mxu0 0.0
    %186 = vmatprep.subr.mxu0 0.0
    %187 = vmatpush1.msra.mxu0 0.0
    %188 = vmatprep.subr.mxu0 0.0
    %189 = vmatpush1.msra.mxu0 0.0
    %190 = vmatprep.subr.mxu0 0.0
    %191 = vmatpush1.msra.mxu0 0.0
    %192 = vmatprep.subr.mxu0 0.0
    %193 = vmatpush1.msra.mxu0 0.0
    %194 = vmatprep.subr.mxu0 0.0
    %195 = vmatpush1.msra.mxu0 0.0
    %196 = vmatprep.subr.mxu0 0.0
    %197 = vmatpush1.msra.mxu0 0.0
    %198 = vmatprep.mubr.f32.mxu0 0.0
    %199 = vmatmul.mubr.f32.gmra.mrb[0].mxu0 %v125
    %v200 = vpop.f32.mrb[0].mxu0
    %v201 = vadd.f32 %v116, %v200
    %v202 = vpop.f32.mrb[0].mxu0
    %203 = vmatprep.mubr.f32.mxu0 0.0
    %204 = vmatmul.mubr.f32.gmra.mrb[0].mxu0 %v128
    %v205 = vpop.f32.mrb[0].mxu0
    %v206 = vadd.f32 %v121, %v205
    %v207 = vpop.f32.mrb[0].mxu0
    %208 = vdwg.mxu0
    %v209 = vmul.f32 %v201, 0.5
    %v210 = vmul.f32 %v206, 0.5
    %v211 = vtanh.pop %v209
    %v212 = vtanh.pop %v210
    %v213 = vmul.f32 %v211, 0.5
    %v214 = vmul.f32 %v212, 0.5
    %v215 = vadd.f32 %v213, 0.5
    %v216 = vadd.f32 %v214, 0.5
    %217 = vst [vmem:[#allocation2] sm:$0xff] %v215
    %218 = vst [vmem:[#allocation2 + $0x8] sm:$0x3] %v216
    // Predicated region
    $region22: #{tpu_custom_call.1} parent=1 // pred_check
      _
    $region23: #{tpu_custom_call.1} parent=1 // pred_check_branch
      %220 = sbr.rel (0) target = $region25
    $region24: #{tpu_custom_call.1} parent=1 // pred_region
      %s222 = ssub.s32 256, 256
      %223 = vsyncadd [#allocation3], %s222
      %s224 = sshll.u32 [#allocation2], 4
      %s225 = int_to_ptr.vmem [resolvable:$true] %s224
      %230 = dma.vmem_to_hbm [thread:$0]  %s225, 256, %s5, [#allocation3], 128, 128, 8
    $region25: #{tpu_custom_call.1} parent=1 // pred_fallthru
      _
    // Predicated region
    $region26: #{tpu_custom_call.1} parent=1 // pred_check
      _
    $region27: #{tpu_custom_call.1} parent=1 // pred_check_branch
      %232 = sbr.rel (0) target = $region29
    $region28: #{tpu_custom_call.1} parent=1 // pred_region
      %233 = dma.done [#allocation3], 256
    $region29: #{tpu_custom_call.1} parent=1 // pred_fallthru
      _
    %234 = vsyncpa [#allocation3], 1

</llo_original>
